<compile_context>
chip_gen: v5e
topology: v5e:2x2
jax: 0.10.0
libtpu: 0.0.40
codegen_flags: <defaults>
</compile_context>

<pallas_src>
import functools

import jax
import jax.numpy as jnp
from jax import lax
from jax.experimental import pallas as pl
from jax.experimental.pallas import tpu as pltpu

LEAKY_SLOPE = 0.1
BN_EPS = 1e-5


def _downconv_kernel(x_ref, w1_ref, s1_ref, t1_ref, w2_ref, s2_ref, t2_ref,
                     *rest, NB, H, W, C_out, pooling, pack, matmul_dtype):
    if pooling:
        sell_ref, selr_ref, pool_ref, bp_ref = rest
    else:
        pool_ref, bp_ref = rest

    WCo = W * C_out
    f32 = jnp.float32

    def conv_bn_lrelu(h3, w_ref, s_ref, t_ref):
        # h3: (NB, H, K) activation in matmul dtype.  The three ky row taps are
        # fused into ONE lane-dense MXU matmul: lane-concatenate the H-shifted
        # activations [x[y-1], x[y], x[y+1]] (K -> 3K) and contract with the
        # (3K, W*C_out) banded weight (kx taps + SAME W-padding folded into the
        # band by the wrapper).  Accumulation is f32.
        K = h3.shape[-1]
        zrow = jnp.zeros((NB, 1, K), h3.dtype)
        up = jnp.concatenate([zrow, h3[:, :H - 1, :]], axis=1)      # x[y-1]
        dn = jnp.concatenate([h3[:, 1:, :], zrow], axis=1)          # x[y+1]
        hcat = jnp.concatenate([up, h3, dn], axis=2)                # (NB,H,3K)
        y = jnp.dot(hcat.reshape(NB * H, 3 * K), w_ref[...],
                    preferred_element_type=f32).reshape(NB, H, WCo)
        y = y * s_ref[...] + t_ref[...]          # conv bias + BatchNorm folded
        return jnp.where(y >= 0.0, y, LEAKY_SLOPE * y)              # f32

    a1 = conv_bn_lrelu(x_ref[...], w1_ref, s1_ref, t1_ref)
    a2 = conv_bn_lrelu(a1.astype(matmul_dtype), w2_ref, s2_ref, t2_ref)
    # Dropout(p=0.5) is identity in eval mode.
    bp_ref[...] = a2                              # lane-dense (NB, H, W*C_out)

    if not pooling:
        pool_ref[...] = a2
        return

    H2 = H // 2
    W2C = (W // 2) * C_out
    H2p = H2 // pack
    # Re-read the just-written tile so a2's live range ends at the store.
    a2v = bp_ref[...]

    # ---- 2x2 max pool, all in-register -------------------------------------
    # (1) W-direction pair max: shift left by one C_out lane group and max.
    zc = jnp.zeros((NB, H, C_out), f32)
    wm = jnp.maximum(a2v, jnp.concatenate([a2v[:, :, C_out:], zc], axis=2))
    # (2) H-direction pair max: shift up one row and max.  Odd rows now hold
    #     cross-window values but are never selected below (zero-pad at row
    #     H-1 is likewise never selected).
    zr = jnp.zeros((NB, 1, WCo), f32)
    hm = jnp.maximum(wm, jnp.concatenate([wm[:, 1:, :], zr], axis=1))
    # (3) even-x lane-group selection: tiny 0/1 matmul (WCo, W2*C_out).
    hx = jnp.dot(hm.reshape(NB * H, WCo), sell_ref[...],
                 preferred_element_type=f32).reshape(NB, H, W2C)
    # (4) even-row selection (+ lane packing of `pack` pooled rows so the store
    #     is lane-dense): per-image 0/1 batched einsum — linear in NB, replaces
    #     the old quadratic (NB*H2, NB*H) selection matmul.
    parts = [jnp.einsum('brh,bhc->brc', selr_ref[p], hx,
                        preferred_element_type=f32) for p in range(pack)]
    pool_ref[...] = parts[0] if pack == 1 else jnp.concatenate(parts, axis=2)


def downconv_forward(x_nchw, params, pooling=True, block_n=None,
                     matmul_dtype=jnp.bfloat16):
    """DownConv forward (eval mode). Returns (pooled, before_pool) in NCHW.

    matmul_dtype=bfloat16 (default) runs the MXU at native rate and halves
    activation/weight traffic; accumulation and all post-matmul elementwise
    math stay f32.  Pass jnp.float32 for bit-accurate reference checks.
    """
    (w1, b1, g1, be1, m1, v1, w2, b2, g2, be2, m2, v2) = params
    N, C_in, H, W = x_nchw.shape
    C_out = w1.shape[-1]
    f32 = jnp.float32
    md = jnp.dtype(matmul_dtype)
    md_bytes = md.itemsize
    WCi, WCo = W * C_in, W * C_out
    if pooling:
        assert H % 2 == 0 and W % 2 == 0
    H2, W2 = H // 2, W // 2
    W2C = W2 * C_out

    # Lane-dense packing of the pooled output: fold `pack` pooled rows onto the
    # lane axis so the pooled store width is a multiple of 128 (no masked vst).
    pack = 1
    if pooling and (W2C % 128) != 0 and (H2 % 2 == 0) and ((2 * W2C) % 128 == 0):
        pack = 2
    H2p = (H2 // pack) if pooling else 0

    # ---- layout glue: NCHW -> (N, H, W*C_in), channels innermost on lanes ---
    x = jnp.transpose(x_nchw, (0, 2, 3, 1)).astype(f32).reshape(N, H, WCi)
    x = x.astype(md)

    # ---- fold conv bias + BatchNorm(running stats) into lane-dense affine ---
    def fold(g, be, m, v, b):
        s = (g / jnp.sqrt(v + BN_EPS)).astype(f32)
        t = (be + s * (b - m)).astype(f32)
        return jnp.tile(s, W).reshape(1, WCo), jnp.tile(t, W).reshape(1, WCo)

    s1, t1 = fold(g1, be1, m1, v1, b1)
    s2, t2 = fold(g2, be2, m2, v2, b2)

    # ---- fused banded conv weights (3*W*ci, W*co): ky & kx taps + SAME
    #      W-padding folded in -> one matmul per conv with K = 3*W*ci ---------
    def band(w, ci, co):
        xin = jnp.arange(W)[:, None]
        xout = jnp.arange(W)[None, :]
        kx = xin - xout + 1                                   # (W, W)
        valid = ((kx >= 0) & (kx <= 2)).astype(f32)
        g = w.astype(f32)[:, jnp.clip(kx, 0, 2)]              # (3, W, W, ci, co)
        g = g * valid[None, :, :, None, None]
        g = g.transpose(0, 1, 3, 2, 4).reshape(3, W * ci, W * co)
        return g.reshape(3 * W * ci, W * co).astype(md)       # ky blocks stacked

    w1b = band(w1, C_in, C_out)
    w2b = band(w2, C_out, C_out)

    # ---- chip-adaptive VMEM budget ------------------------------------------
    try:
        vmem_cap = int(pltpu.get_tpu_info().vmem_capacity_bytes)
    except Exception:
        vmem_cap = 64 * 1024 * 1024          # conservative (v7x-sized) fallback
    vmem_limit = int(min(64 << 20, max(32 << 20, vmem_cap // 2)))

    # ---- batch-block size: fill the MXU M dim, keep >= 2 grid steps (v7x has
    #      two TensorCores + cross-step DMA overlap), fit VMEM, and bound the
    #      vreg live-set so activations don't spill onto the vld/vst slots -----
    if block_n is None:
        nb_rows = max(1, -(-256 // H))                     # NB*H >= 256
        nb_grid = max(1, N // 2) if N > 1 else 1
        resident = md_bytes * 3 * WCo * (WCi + WCo) + 4 * 4 * WCo
        per_img = 2 * H * WCi * md_bytes + 2 * H * WCo * 4
        if pooling:
            resident += 4 * (WCo * W2C + pack * H2p * H)
            per_img += 2 * H2 * W2C * 4
        budget = max(1 << 20, vmem_limit // 2 - resident)
        nb_vmem = max(1, budget // per_img)
        nb_vreg = max(1, (56 * 1024) // (6 * H * WCo))
        cap = max(1, min(nb_rows, nb_grid, nb_vmem, nb_vreg))
        block_n = 1
        for d in range(1, N + 1):
            if N % d == 0 and d <= cap:
                block_n = d
    NB = block_n
    assert N % NB == 0
    grid = (N // NB,)

    kernel = functools.partial(_downconv_kernel, NB=NB, H=H, W=W, C_out=C_out,
                               pooling=pooling, pack=pack, matmul_dtype=md)

    def fullspec(shape):
        return pl.BlockSpec(shape, lambda i, n=len(shape): (0,) * n)

    in_specs = [
        pl.BlockSpec((NB, H, WCi), lambda i: (i, 0, 0)),
        fullspec((3 * WCi, WCo)),
        fullspec((1, WCo)), fullspec((1, WCo)),
        fullspec((3 * WCo, WCo)),
        fullspec((1, WCo)), fullspec((1, WCo)),
    ]
    operands = [x, w1b, s1, t1, w2b, s2, t2]

    if pooling:
        # 0/1 lane selector: even x lane-groups of C_out.
        li, lo = jnp.arange(WCo), jnp.arange(W2C)
        sel_l = ((li[:, None] // C_out == 2 * (lo[None, :] // C_out)) &
                 (li[:, None] % C_out == lo[None, :] % C_out)).astype(f32)
        # 0/1 row selectors: part p picks source row 2*(pack*r + p).
        rr = jnp.arange(H2p)[None, :, None]
        hh = jnp.arange(H)[None, None, :]
        pp = jnp.arange(pack)[:, None, None]
        sel_r = (hh == 2 * (pack * rr + pp)).astype(f32)        # (pack, H2p, H)
        sel_r = jnp.broadcast_to(sel_r[:, None], (pack, NB, H2p, H))
        in_specs += [fullspec((WCo, W2C)), fullspec((pack, NB, H2p, H))]
        operands += [sel_l, sel_r]
        pool_shape = (N, H2p, pack * W2C)
        pool_block = (NB, H2p, pack * W2C)
    else:
        pool_shape = (N, H, WCo)
        pool_block = (NB, H, WCo)

    # Executed (banded) MXU flops and real operand byte widths.
    flops = 2 * N * H * 3 * WCo * (WCi + WCo)
    bytes_accessed = (md_bytes * (N * H * WCi + 3 * WCo * (WCi + WCo))
                      + 4 * (4 * WCo + N * H * WCo))
    if pooling:
        flops += 2 * N * H * WCo * W2C + 2 * N * H2 * H * W2C
        bytes_accessed += 4 * (N * H2 * W2C + WCo * W2C + pack * NB * H2p * H)
    else:
        bytes_accessed += 4 * N * H * WCo

    pooled, before_pool = pl.pallas_call(
        kernel,
        grid=grid,
        in_specs=in_specs,
        out_specs=[
            pl.BlockSpec(pool_block, lambda i: (i, 0, 0)),
            pl.BlockSpec((NB, H, WCo), lambda i: (i, 0, 0)),
        ],
        out_shape=[
            jax.ShapeDtypeStruct(pool_shape, f32),
            jax.ShapeDtypeStruct((N, H, WCo), f32),
        ],
        compiler_params=pltpu.CompilerParams(
            dimension_semantics=("parallel",),
            vmem_limit_bytes=vmem_limit),
        cost_estimate=pl.CostEstimate(flops=int(flops), transcendentals=0,
                                      bytes_accessed=int(bytes_accessed)),
    )(*operands)

    # ---- layout glue back to PyTorch NCHW -----------------------------------
    before_pool = before_pool.reshape(N, H, W, C_out).transpose(0, 3, 1, 2)
    if pooling:
        pooled = pooled.reshape(N, H2, W2, C_out).transpose(0, 3, 1, 2)
    else:
        pooled = pooled.reshape(N, H, W, C_out).transpose(0, 3, 1, 2)
    return pooled, before_pool


def init_params(key, c_in, c_out):
    ks = jax.random.split(key, 12)
    w1 = 0.10 * jax.random.normal(ks[0], (3, 3, c_in, c_out), jnp.float32)
    b1 = 0.05 * jax.random.normal(ks[1], (c_out,), jnp.float32)
    g1 = 1.0 + 0.10 * jax.random.normal(ks[2], (c_out,), jnp.float32)
    be1 = 0.05 * jax.random.normal(ks[3], (c_out,), jnp.float32)
    m1 = 0.02 * jax.random.normal(ks[4], (c_out,), jnp.float32)
    v1 = 1.0 + 0.10 * jax.random.uniform(ks[5], (c_out,), jnp.float32)
    w2 = 0.10 * jax.random.normal(ks[6], (3, 3, c_out, c_out), jnp.float32)
    b2 = 0.05 * jax.random.normal(ks[7], (c_out,), jnp.float32)
    g2 = 1.0 + 0.10 * jax.random.normal(ks[8], (c_out,), jnp.float32)
    be2 = 0.05 * jax.random.normal(ks[9], (c_out,), jnp.float32)
    m2 = 0.02 * jax.random.normal(ks[10], (c_out,), jnp.float32)
    v2 = 1.0 + 0.10 * jax.random.uniform(ks[11], (c_out,), jnp.float32)
    return (w1, b1, g1, be1, m1, v1, w2, b2, g2, be2, m2, v2)


def reference_forward(x_nchw, params, pooling=True):
    (w1, b1, g1, be1, m1, v1, w2, b2, g2, be2, m2, v2) = params
    x = jnp.transpose(x_nchw, (0, 2, 3, 1)).astype(jnp.float32)   # NHWC

    def conv(h, w, b):
        y = lax.conv_general_dilated(h, w, (1, 1), 'SAME',
                                     dimension_numbers=('NHWC', 'HWIO', 'NHWC'))
        return y + b

    def bn(h, g, be, m, v):
        return (h - m) * g / jnp.sqrt(v + BN_EPS) + be

    h = jax.nn.leaky_relu(bn(conv(x, w1, b1), g1, be1, m1, v1), LEAKY_SLOPE)
    h = jax.nn.leaky_relu(bn(conv(h, w2, b2), g2, be2, m2, v2), LEAKY_SLOPE)
    bp = h
    if pooling:
        h = lax.reduce_window(h, -jnp.inf, lax.max,
                              (1, 2, 2, 1), (1, 2, 2, 1), 'VALID')
    return (jnp.transpose(h, (0, 3, 1, 2)),
            jnp.transpose(bp, (0, 3, 1, 2)))


if __name__ == "__main__":
    key = jax.random.PRNGKey(0)
    kx, kp = jax.random.split(key)
    N, C_in, H, W, C_out = 2, 4, 16, 16, 8
    x = jax.random.normal(kx, (N, C_in, H, W), jnp.float32)   # PyTorch NCHW input
    params = init_params(kp, C_in, C_out)

    ref_pooled, ref_bp = reference_forward(x, params, pooling=True)

    # Default bf16 MXU path (f32 accumulation + f32 affine/LeakyReLU).
    pooled, before_pool = downconv_forward(x, params, pooling=True)
    jax.block_until_ready((pooled, before_pool))
    assert pooled.shape == (N, C_out, H // 2, W // 2)
    assert before_pool.shape == (N, C_out, H, W)
    assert jnp.allclose(pooled, ref_pooled, atol=5e-2, rtol=5e-2)
    assert jnp.allclose(before_pool, ref_bp, atol=5e-2, rtol=5e-2)

    # f32 path: tight numerical check of the banded/pooling formulation.
    pooled32, bp32 = downconv_forward(x, params, pooling=True,
                                      matmul_dtype=jnp.float32)
    jax.block_until_ready((pooled32, bp32))
    assert jnp.allclose(pooled32, ref_pooled, atol=1e-3, rtol=1e-3)
    assert jnp.allclose(bp32, ref_bp, atol=1e-3, rtol=1e-3)

    # pooling=False variant of the module.
    np_pooled, np_bp = downconv_forward(x, params, pooling=False)
    jax.block_until_ready((np_pooled, np_bp))
    rp2, rb2 = reference_forward(x, params, pooling=False)
    assert jnp.allclose(np_pooled, rp2, atol=5e-2, rtol=5e-2)
    assert jnp.allclose(np_bp, rb2, atol=5e-2, rtol=5e-2)

    print("KERNEL_OK")
</pallas_src>

<mosaic_0001>
module attributes {stable_mosaic.version = 11 : i64} {
  func.func @_downconv_kernel(%arg0: i32, %arg1: memref<1x16x64xbf16, #tpu.memory_space<vmem>>, %arg2: memref<192x128xbf16, #tpu.memory_space<vmem>>, %arg3: memref<1x128xf32, #tpu.memory_space<vmem>>, %arg4: memref<1x128xf32, #tpu.memory_space<vmem>>, %arg5: memref<384x128xbf16, #tpu.memory_space<vmem>>, %arg6: memref<1x128xf32, #tpu.memory_space<vmem>>, %arg7: memref<1x128xf32, #tpu.memory_space<vmem>>, %arg8: memref<128x64xf32, #tpu.memory_space<vmem>>, %arg9: memref<2x1x4x16xf32, #tpu.memory_space<vmem>>, %arg10: memref<1x4x128xf32, #tpu.memory_space<vmem>>, %arg11: memref<1x16x128xf32, #tpu.memory_space<vmem>>) attributes {dimension_semantics = [#tpu.dimension_semantics<parallel>], iteration_bounds = array<i64: 2>, scalar_prefetch = 0 : i64, scratch_operands = 0 : i64, tpu.core_type = #tpu.core_type<tc>, window_params = [{transform_indices = @transform_0, window_bounds = array<i64: 1, 16, 64>}, {pipeline_mode = #tpu.pipeline_mode<synchronous>, transform_indices = @transform_1, window_bounds = array<i64: 192, 128>}, {pipeline_mode = #tpu.pipeline_mode<synchronous>, transform_indices = @transform_2, window_bounds = array<i64: 1, 128>}, {pipeline_mode = #tpu.pipeline_mode<synchronous>, transform_indices = @transform_3, window_bounds = array<i64: 1, 128>}, {pipeline_mode = #tpu.pipeline_mode<synchronous>, transform_indices = @transform_4, window_bounds = array<i64: 384, 128>}, {pipeline_mode = #tpu.pipeline_mode<synchronous>, transform_indices = @transform_5, window_bounds = array<i64: 1, 128>}, {pipeline_mode = #tpu.pipeline_mode<synchronous>, transform_indices = @transform_6, window_bounds = array<i64: 1, 128>}, {pipeline_mode = #tpu.pipeline_mode<synchronous>, transform_indices = @transform_7, window_bounds = array<i64: 128, 64>}, {pipeline_mode = #tpu.pipeline_mode<synchronous>, transform_indices = @transform_8, window_bounds = array<i64: 2, 1, 4, 16>}, {transform_indices = @transform_9, window_bounds = array<i64: 1, 4, 128>}, {transform_indices = @transform_10, window_bounds = array<i64: 1, 16, 128>}]} {
    %c0 = arith.constant 0 : index
    %c0_0 = arith.constant 0 : index
    %c0_1 = arith.constant 0 : index
    %0 = vector.load %arg1[%c0, %c0_0, %c0_1] : memref<1x16x64xbf16, #tpu.memory_space<vmem>>, vector<1x16x64xbf16>
    %cst = arith.constant 0.000000e+00 : bf16
    %1 = vector.broadcast %cst : bf16 to vector<1x1x64xbf16>
    %2 = vector.extract_strided_slice %0 {offsets = [0, 0, 0], sizes = [1, 15, 64], strides = [1, 1, 1]} : vector<1x16x64xbf16> to vector<1x15x64xbf16>
    %3 = tpu.concatenate %1, %2 in 1 : vector<1x1x64xbf16>, vector<1x15x64xbf16> -> vector<1x16x64xbf16>
    %4 = vector.extract_strided_slice %0 {offsets = [0, 1, 0], sizes = [1, 15, 64], strides = [1, 1, 1]} : vector<1x16x64xbf16> to vector<1x15x64xbf16>
    %5 = tpu.concatenate %4, %1 in 1 : vector<1x15x64xbf16>, vector<1x1x64xbf16> -> vector<1x16x64xbf16>
    %6 = tpu.concatenate %3, %0, %5 in 2 : vector<1x16x64xbf16>, vector<1x16x64xbf16>, vector<1x16x64xbf16> -> vector<1x16x192xbf16>
    %7 = vector.shape_cast %6 : vector<1x16x192xbf16> to vector<16x192xbf16>
    %c0_2 = arith.constant 0 : index
    %c0_3 = arith.constant 0 : index
    %8 = vector.load %arg2[%c0_2, %c0_3] : memref<192x128xbf16, #tpu.memory_space<vmem>>, vector<192x128xbf16>
    %cst_4 = arith.constant dense<0.000000e+00> : vector<16x128xf32>
    %9 = tpu.matmul %7, %8, %cst_4 {dimension_numbers = #tpu.dot_dimension_numbers<[1], [0], [0], [1], [0, 0, 1, 1], [], []>} : vector<16x192xbf16>, vector<192x128xbf16>, vector<16x128xf32> -> vector<16x128xf32>
    %10 = vector.shape_cast %9 : vector<16x128xf32> to vector<1x16x128xf32>
    %c0_5 = arith.constant 0 : index
    %c0_6 = arith.constant 0 : index
    %11 = vector.load %arg3[%c0_5, %c0_6] : memref<1x128xf32, #tpu.memory_space<vmem>>, vector<1x128xf32>
    %12 = vector.shape_cast %11 : vector<1x128xf32> to vector<1x1x128xf32>
    %13 = vector.broadcast %12 : vector<1x1x128xf32> to vector<1x16x128xf32>
    %14 = arith.mulf %10, %13 : vector<1x16x128xf32>
    %c0_7 = arith.constant 0 : index
    %c0_8 = arith.constant 0 : index
    %15 = vector.load %arg4[%c0_7, %c0_8] : memref<1x128xf32, #tpu.memory_space<vmem>>, vector<1x128xf32>
    %16 = vector.shape_cast %15 : vector<1x128xf32> to vector<1x1x128xf32>
    %17 = vector.broadcast %16 : vector<1x1x128xf32> to vector<1x16x128xf32>
    %18 = arith.addf %14, %17 : vector<1x16x128xf32>
    %cst_9 = arith.constant 0.000000e+00 : f32
    %19 = vector.broadcast %cst_9 : f32 to vector<1x16x128xf32>
    %20 = arith.cmpf oge, %18, %19 : vector<1x16x128xf32>
    %cst_10 = arith.constant 1.000000e-01 : f32
    %21 = vector.broadcast %cst_10 : f32 to vector<1x16x128xf32>
    %22 = arith.mulf %21, %18 : vector<1x16x128xf32>
    %23 = arith.select %20, %18, %22 : vector<1x16x128xi1>, vector<1x16x128xf32>
    %24 = arith.truncf %23 : vector<1x16x128xf32> to vector<1x16x128xbf16>
    %cst_11 = arith.constant 0.000000e+00 : bf16
    %25 = vector.broadcast %cst_11 : bf16 to vector<1x1x128xbf16>
    %26 = vector.extract_strided_slice %24 {offsets = [0, 0, 0], sizes = [1, 15, 128], strides = [1, 1, 1]} : vector<1x16x128xbf16> to vector<1x15x128xbf16>
    %27 = tpu.concatenate %25, %26 in 1 : vector<1x1x128xbf16>, vector<1x15x128xbf16> -> vector<1x16x128xbf16>
    %28 = vector.extract_strided_slice %24 {offsets = [0, 1, 0], sizes = [1, 15, 128], strides = [1, 1, 1]} : vector<1x16x128xbf16> to vector<1x15x128xbf16>
    %29 = tpu.concatenate %28, %25 in 1 : vector<1x15x128xbf16>, vector<1x1x128xbf16> -> vector<1x16x128xbf16>
    %30 = tpu.concatenate %27, %24, %29 in 2 : vector<1x16x128xbf16>, vector<1x16x128xbf16>, vector<1x16x128xbf16> -> vector<1x16x384xbf16>
    %31 = vector.shape_cast %30 : vector<1x16x384xbf16> to vector<16x384xbf16>
    %c0_12 = arith.constant 0 : index
    %c0_13 = arith.constant 0 : index
    %32 = vector.load %arg5[%c0_12, %c0_13] : memref<384x128xbf16, #tpu.memory_space<vmem>>, vector<384x128xbf16>
    %cst_14 = arith.constant dense<0.000000e+00> : vector<16x128xf32>
    %33 = tpu.matmul %31, %32, %cst_14 {dimension_numbers = #tpu.dot_dimension_numbers<[1], [0], [0], [1], [0, 0, 1, 1], [], []>} : vector<16x384xbf16>, vector<384x128xbf16>, vector<16x128xf32> -> vector<16x128xf32>
    %34 = vector.shape_cast %33 : vector<16x128xf32> to vector<1x16x128xf32>
    %c0_15 = arith.constant 0 : index
    %c0_16 = arith.constant 0 : index
    %35 = vector.load %arg6[%c0_15, %c0_16] : memref<1x128xf32, #tpu.memory_space<vmem>>, vector<1x128xf32>
    %36 = vector.shape_cast %35 : vector<1x128xf32> to vector<1x1x128xf32>
    %37 = vector.broadcast %36 : vector<1x1x128xf32> to vector<1x16x128xf32>
    %38 = arith.mulf %34, %37 : vector<1x16x128xf32>
    %c0_17 = arith.constant 0 : index
    %c0_18 = arith.constant 0 : index
    %39 = vector.load %arg7[%c0_17, %c0_18] : memref<1x128xf32, #tpu.memory_space<vmem>>, vector<1x128xf32>
    %40 = vector.shape_cast %39 : vector<1x128xf32> to vector<1x1x128xf32>
    %41 = vector.broadcast %40 : vector<1x1x128xf32> to vector<1x16x128xf32>
    %42 = arith.addf %38, %41 : vector<1x16x128xf32>
    %cst_19 = arith.constant 0.000000e+00 : f32
    %43 = vector.broadcast %cst_19 : f32 to vector<1x16x128xf32>
    %44 = arith.cmpf oge, %42, %43 : vector<1x16x128xf32>
    %cst_20 = arith.constant 1.000000e-01 : f32
    %45 = vector.broadcast %cst_20 : f32 to vector<1x16x128xf32>
    %46 = arith.mulf %45, %42 : vector<1x16x128xf32>
    %47 = arith.select %44, %42, %46 : vector<1x16x128xi1>, vector<1x16x128xf32>
    %c0_21 = arith.constant 0 : index
    %c0_22 = arith.constant 0 : index
    %c0_23 = arith.constant 0 : index
    %48 = vector.load %arg11[%c0_21, %c0_22, %c0_23] : memref<1x16x128xf32, #tpu.memory_space<vmem>>, vector<1x16x128xf32>
    tpu.vector_store %arg11[%c0_21, %c0_22, %c0_23], %47 {strides = array<i32>} : memref<1x16x128xf32, #tpu.memory_space<vmem>>, vector<1x16x128xf32>,
    %c0_24 = arith.constant 0 : index
    %c0_25 = arith.constant 0 : index
    %c0_26 = arith.constant 0 : index
    %49 = vector.load %arg11[%c0_24, %c0_25, %c0_26] : memref<1x16x128xf32, #tpu.memory_space<vmem>>, vector<1x16x128xf32>
    %cst_27 = arith.constant 0.000000e+00 : f32
    %50 = vector.broadcast %cst_27 : f32 to vector<1x16x8xf32>
    %51 = vector.extract_strided_slice %49 {offsets = [0, 0, 8], sizes = [1, 16, 120], strides = [1, 1, 1]} : vector<1x16x128xf32> to vector<1x16x120xf32>
    %52 = tpu.concatenate %51, %50 in 2 : vector<1x16x120xf32>, vector<1x16x8xf32> -> vector<1x16x128xf32>
    %53 = arith.maximumf %49, %52 : vector<1x16x128xf32>
    %cst_28 = arith.constant 0.000000e+00 : f32
    %54 = vector.broadcast %cst_28 : f32 to vector<1x1x128xf32>
    %55 = vector.extract_strided_slice %53 {offsets = [0, 1, 0], sizes = [1, 15, 128], strides = [1, 1, 1]} : vector<1x16x128xf32> to vector<1x15x128xf32>
    %56 = tpu.concatenate %55, %54 in 1 : vector<1x15x128xf32>, vector<1x1x128xf32> -> vector<1x16x128xf32>
    %57 = arith.maximumf %53, %56 : vector<1x16x128xf32>
    %58 = vector.shape_cast %57 : vector<1x16x128xf32> to vector<16x128xf32>
    %c0_29 = arith.constant 0 : index
    %c0_30 = arith.constant 0 : index
    %59 = vector.load %arg8[%c0_29, %c0_30] : memref<128x64xf32, #tpu.memory_space<vmem>>, vector<128x64xf32>
    %cst_31 = arith.constant dense<0.000000e+00> : vector<16x64xf32>
    %60 = tpu.matmul %58, %59, %cst_31 {dimension_numbers = #tpu.dot_dimension_numbers<[1], [0], [0], [1], [0, 0, 1, 1], [], []>} : vector<16x128xf32>, vector<128x64xf32>, vector<16x64xf32> -> vector<16x64xf32>
    %61 = vector.shape_cast %60 : vector<16x64xf32> to vector<1x16x64xf32>
    %c0_32 = arith.constant 0 : index
    %c0_33 = arith.constant 0 : index
    %c0_34 = arith.constant 0 : index
    %c0_35 = arith.constant 0 : index
    %62 = vector.load %arg9[%c0_32, %c0_33, %c0_34, %c0_35] : memref<2x1x4x16xf32, #tpu.memory_space<vmem>>, vector<1x1x4x16xf32>
    %63 = vector.shape_cast %62 : vector<1x1x4x16xf32> to vector<1x4x16xf32>
    "tpu.trace_start"() <{level = 10 : i32, message = "brh,bhc->brc"}> : () -> ()
    %cst_36 = arith.constant dense<0.000000e+00> : vector<1x4x64xf32>
    %64 = tpu.matmul %63, %61, %cst_36 {dimension_numbers = #tpu.dot_dimension_numbers<[2], [1], [1], [2], [0, 0, 0, 1, 1, 2], [0], [0]>} : vector<1x4x16xf32>, vector<1x16x64xf32>, vector<1x4x64xf32> -> vector<1x4x64xf32>
    "tpu.trace_stop"() : () -> ()
    %c1 = arith.constant 1 : index
    %c0_37 = arith.constant 0 : index
    %c0_38 = arith.constant 0 : index
    %c0_39 = arith.constant 0 : index
    %65 = vector.load %arg9[%c1, %c0_37, %c0_38, %c0_39] : memref<2x1x4x16xf32, #tpu.memory_space<vmem>>, vector<1x1x4x16xf32>
    %66 = vector.shape_cast %65 : vector<1x1x4x16xf32> to vector<1x4x16xf32>
    "tpu.trace_start"() <{level = 10 : i32, message = "brh,bhc->brc"}> : () -> ()
    %cst_40 = arith.constant dense<0.000000e+00> : vector<1x4x64xf32>
    %67 = tpu.matmul %66, %61, %cst_40 {dimension_numbers = #tpu.dot_dimension_numbers<[2], [1], [1], [2], [0, 0, 0, 1, 1, 2], [0], [0]>} : vector<1x4x16xf32>, vector<1x16x64xf32>, vector<1x4x64xf32> -> vector<1x4x64xf32>
    "tpu.trace_stop"() : () -> ()
    %68 = tpu.concatenate %64, %67 in 2 : vector<1x4x64xf32>, vector<1x4x64xf32> -> vector<1x4x128xf32>
    %c0_41 = arith.constant 0 : index
    %c0_42 = arith.constant 0 : index
    %c0_43 = arith.constant 0 : index
    %69 = vector.load %arg10[%c0_41, %c0_42, %c0_43] : memref<1x4x128xf32, #tpu.memory_space<vmem>>, vector<1x4x128xf32>
    tpu.vector_store %arg10[%c0_41, %c0_42, %c0_43], %68 {strides = array<i32>} : memref<1x4x128xf32, #tpu.memory_space<vmem>>, vector<1x4x128xf32>,
    return
  }
  func.func @transform_0(%arg0: i32) -> (i32, i32, i32) {
    %c0_i32 = arith.constant 0 : i32
    %c0_i32_0 = arith.constant 0 : i32
    %c0_i32_1 = arith.constant 0 : i32
    return %arg0, %c0_i32, %c0_i32_0 : i32, i32, i32
  }
  func.func @transform_1(%arg0: i32) -> (i32, i32) {
    %c0_i32 = arith.constant 0 : i32
    %c0_i32_0 = arith.constant 0 : i32
    %c0_i32_1 = arith.constant 0 : i32
    return %c0_i32, %c0_i32_0 : i32, i32
  }
  func.func @transform_2(%arg0: i32) -> (i32, i32) {
    %c0_i32 = arith.constant 0 : i32
    %c0_i32_0 = arith.constant 0 : i32
    %c0_i32_1 = arith.constant 0 : i32
    return %c0_i32, %c0_i32_0 : i32, i32
  }
  func.func @transform_3(%arg0: i32) -> (i32, i32) {
    %c0_i32 = arith.constant 0 : i32
    %c0_i32_0 = arith.constant 0 : i32
    %c0_i32_1 = arith.constant 0 : i32
    return %c0_i32, %c0_i32_0 : i32, i32
  }
  func.func @transform_4(%arg0: i32) -> (i32, i32) {
    %c0_i32 = arith.constant 0 : i32
    %c0_i32_0 = arith.constant 0 : i32
    %c0_i32_1 = arith.constant 0 : i32
    return %c0_i32, %c0_i32_0 : i32, i32
  }
  func.func @transform_5(%arg0: i32) -> (i32, i32) {
    %c0_i32 = arith.constant 0 : i32
    %c0_i32_0 = arith.constant 0 : i32
    %c0_i32_1 = arith.constant 0 : i32
    return %c0_i32, %c0_i32_0 : i32, i32
  }
  func.func @transform_6(%arg0: i32) -> (i32, i32) {
    %c0_i32 = arith.constant 0 : i32
    %c0_i32_0 = arith.constant 0 : i32
    %c0_i32_1 = arith.constant 0 : i32
    return %c0_i32, %c0_i32_0 : i32, i32
  }
  func.func @transform_7(%arg0: i32) -> (i32, i32) {
    %c0_i32 = arith.constant 0 : i32
    %c0_i32_0 = arith.constant 0 : i32
    %c0_i32_1 = arith.constant 0 : i32
    return %c0_i32, %c0_i32_0 : i32, i32
  }
  func.func @transform_8(%arg0: i32) -> (i32, i32, i32, i32) {
    %c0_i32 = arith.constant 0 : i32
    %c0_i32_0 = arith.constant 0 : i32
    %c0_i32_1 = arith.constant 0 : i32
    %c0_i32_2 = arith.constant 0 : i32
    %c0_i32_3 = arith.constant 0 : i32
    return %c0_i32, %c0_i32_0, %c0_i32_1, %c0_i32_2 : i32, i32, i32, i32
  }
  func.func @transform_9(%arg0: i32) -> (i32, i32, i32) {
    %c0_i32 = arith.constant 0 : i32
    %c0_i32_0 = arith.constant 0 : i32
    %c0_i32_1 = arith.constant 0 : i32
    return %arg0, %c0_i32, %c0_i32_0 : i32, i32, i32
  }
  func.func @transform_10(%arg0: i32) -> (i32, i32, i32) {
    %c0_i32 = arith.constant 0 : i32
    %c0_i32_0 = arith.constant 0 : i32
    %c0_i32_1 = arith.constant 0 : i32
    return %arg0, %c0_i32, %c0_i32_0 : i32, i32, i32
  }
}

</mosaic_0001>

<llo_original>
// kernel: tpu_custom_call.1
$region0: #{tpu_custom_call.1}
  #allocation0 [shape = 'u32[]', space=smem, size = 0x4, offset = 0x4, fixed_abs, tag = 'smem constant byte address 0x4 - core index']
  #allocation1 [shape = 'u32[72,128]{1,0:T(1,128)}', space=vmem, size = 0x9000, scoped, tag = 'internal scratch']
  %s0 = inlined_call_operand.hbm [shape: bf16[2,16,64], index: 0, kind: input, shape index: {}]
  %s1 = inlined_call_operand.hbm [shape: bf16[192,128], index: 1, kind: input, shape index: {}]
  %s2 = inlined_call_operand.vmem [shape: f32[1,128], index: 2, kind: input, shape index: {}]
  %s3 = inlined_call_operand.vmem [shape: f32[1,128], index: 3, kind: input, shape index: {}]
  %s4 = inlined_call_operand.vmem [shape: bf16[384,128], index: 4, kind: input, shape index: {}]
  %s5 = inlined_call_operand.vmem [shape: f32[1,128], index: 5, kind: input, shape index: {}]
  %s6 = inlined_call_operand.vmem [shape: f32[1,128], index: 6, kind: input, shape index: {}]
  %s7 = inlined_call_operand.vmem [shape: f32[128,64], index: 7, kind: input, shape index: {}]
  %s8 = inlined_call_operand.hbm [shape: f32[2,1,4,16], index: 8, kind: input, shape index: {}]
  %s9 = inlined_call_operand.hbm [shape: f32[2,4,128], index: 9, kind: output, shape index: {0}]
  %s10 = inlined_call_operand.hbm [shape: f32[2,16,128], index: 10, kind: output, shape index: {1}]
  %11 = xla_tuple %s9, %s10
  %s12 = sld [smem:[#allocation0]]
  $region89: #{tpu_custom_call.1} parent=0
    _
  %s14 = ssub.s32 1, %s12
  %s15 = scalar_select 0, %s14, %s12
  $region1: #{tpu_custom_call.1} parent=0
    #allocation2 [shape = 'u8[8192]{0}', space=vmem, size = 0x2000, scoped, tag = 'input window, operand 0']
    #allocation3 [shape = 's32[2]{0}', space=sflag, size = 0x8, scoped, tag = 'scoped memory for tpu_custom_call.1']
    #allocation4 [shape = 's32[2]{0}', space=sflag, size = 0x8, scoped, tag = 'scoped memory for tpu_custom_call.1']
    #allocation5 [shape = 'u8[49152]{0}', space=vmem, size = 0xc000, scoped, tag = 'input window, operand 1, single buffered']
    #allocation6 [shape = 's32[1]{0}', space=sflag, size = 0x4, scoped, tag = 'scoped memory for tpu_custom_call.1']
    #allocation7 [shape = 'u8[4096]{0}', space=vmem, size = 0x1000, scoped, tag = 'input window, operand 8, single buffered']
    #allocation8 [shape = 'u8[4096]{0}', space=vmem, size = 0x1000, scoped, tag = 'output window, operand 0']
    #allocation9 [shape = 'u8[16384]{0}', space=vmem, size = 0x4000, scoped, tag = 'output window, operand 1']
    #allocation10 [shape = 's32[2]{0}', space=sflag, size = 0x8, scoped, tag = 'scoped memory for tpu_custom_call.1']
    %16 = vsyncpa [#allocation3], 0
    %s17 = scalar_lea.sflag [#allocation3], 1
    %18 = vsyncpa %s17, 0
    %19 = vsyncpa [#allocation6], 0
    %20 = vsyncpa [#allocation4], 0
    %s21 = scalar_lea.sflag [#allocation4], 1
    %22 = vsyncpa %s21, 0
    %23 = vsyncpa [#allocation10], 0
    %s24 = scalar_lea.sflag [#allocation10], 1
    %25 = vsyncpa %s24, 0
    loop: start=0, step=1, limit=4
    $region2: #{tpu_custom_call.1} parent=1 // loop_pre_header
      _
    $region3: #{tpu_custom_call.1} parent=1 // loop_header
      %s27 = sphi 0, %s31
      %p28 = scmp.ge.s32.totalorder %s27, 4
      %s37 = sphi 0, %s39
      %s40 = sphi 0, %s37
      %s41 = sphi 0, %s40
      %s57 = sphi 0, %s41
      %s61 = sphi 0, %s61
      %s63 = sphi 0, %s61
      %s64 = sphi 0, %s63
      %s78 = sphi 0, %s64
      %s82 = sphi 0, %s82
      %s84 = sphi 0, %s82
      %s85 = sphi 0, %s84
      %s99 = sphi 0, %s85
      %s103 = sphi 0, %s103
      %s105 = sphi 0, %s103
      %s106 = sphi 0, %s105
      %s120 = sphi 0, %s106
      %s124 = sphi 0, %s124
      %s126 = sphi 0, %s124
      %s127 = sphi 0, %s126
      %s141 = sphi 0, %s127
      %s145 = sphi 0, %s145
      %s147 = sphi 0, %s145
      %s148 = sphi 0, %s147
      %s162 = sphi 0, %s148
      %s166 = sphi 0, %s166
      %s168 = sphi 0, %s166
      %s169 = sphi 0, %s168
      %s183 = sphi 0, %s169
      %s187 = sphi 0, %s187
      %s189 = sphi 0, %s187
      %s190 = sphi 0, %s189
      %s204 = sphi 0, %s190
      %s208 = sphi 0, %s208
      %s210 = sphi 0, %s208
      %s211 = sphi 0, %s210
      %s225 = sphi 0, %s211
      %s231 = sphi 0, %s233
      %s234 = sphi 0, %s231
      %s235 = sphi 0, %s234
      %s251 = sphi 0, %s235
      %s257 = sphi 0, %s259
      %s260 = sphi 0, %s257
      %s261 = sphi 0, %s260
      %s277 = sphi 0, %s261
    $region4: #{tpu_custom_call.1} parent=1 // loop_header_branch
      %30 = sbr.rel (%p28) target = $region8
    $region5: #{tpu_custom_call.1} parent=1 // loop_body
      %s32 = ssub.s32 %s27, 1
      %s33 = ssub.s32 %s27, 2
      %s34 = sadd.s32 %s27, 1
      %s35 = ssub.s32 %s27, %s34
      %p36 = scmp.eq.s32.totalorder %s35, 0
      %s38 = sadd.s32 %s37, 1
      %s39 = scalar_select %p36, %s37, %s38
      %p42 = pneg %p36
      %p43 = scmp.eq.s32.totalorder %s27, 1
      %p44 = por %p42, %p43
      %p45 = scmp.ne.s32.totalorder %s37, %s40
      %p46 = scmp.eq.s32.totalorder %s27, 0
      %p47 = por %p45, %p46
      %p48 = scmp.ne.s32.totalorder %s37, %s40
      %p49 = scmp.eq.s32.totalorder %s32, 1
      %p50 = por %p48, %p49
      %p51 = scmp.ne.s32.totalorder %s40, %s41
      %p52 = scmp.eq.s32.totalorder %s32, 0
      %p53 = por %p51, %p52
      %p54 = scmp.ne.s32.totalorder %s40, %s41
      %p55 = scmp.eq.s32.totalorder %s33, 1
      %p56 = por %p54, %p55
      %p58 = scmp.ne.s32.totalorder %s41, %s57
      %p59 = scmp.eq.s32.totalorder %s33, 0
      %p60 = por %p58, %p59
      %s62 = sadd.s32 %s61, 1
      %p65 = scmp.eq.s32.totalorder %s27, 1
      %p66 = scmp.ne.s32.totalorder %s61, %s63
      %p67 = scmp.eq.s32.totalorder %s27, 0
      %p68 = por %p66, %p67
      %p69 = scmp.ne.s32.totalorder %s61, %s63
      %p70 = scmp.eq.s32.totalorder %s32, 1
      %p71 = por %p69, %p70
      %p72 = scmp.ne.s32.totalorder %s63, %s64
      %p73 = scmp.eq.s32.totalorder %s32, 0
      %p74 = por %p72, %p73
      %p75 = scmp.ne.s32.totalorder %s63, %s64
      %p76 = scmp.eq.s32.totalorder %s33, 1
      %p77 = por %p75, %p76
      %p79 = scmp.ne.s32.totalorder %s64, %s78
      %p80 = scmp.eq.s32.totalorder %s33, 0
      %p81 = por %p79, %p80
      %s83 = sadd.s32 %s82, 1
      %p86 = scmp.eq.s32.totalorder %s27, 1
      %p87 = scmp.ne.s32.totalorder %s82, %s84
      %p88 = scmp.eq.s32.totalorder %s27, 0
      %p89 = por %p87, %p88
      %p90 = scmp.ne.s32.totalorder %s82, %s84
      %p91 = scmp.eq.s32.totalorder %s32, 1
      %p92 = por %p90, %p91
      %p93 = scmp.ne.s32.totalorder %s84, %s85
      %p94 = scmp.eq.s32.totalorder %s32, 0
      %p95 = por %p93, %p94
      %p96 = scmp.ne.s32.totalorder %s84, %s85
      %p97 = scmp.eq.s32.totalorder %s33, 1
      %p98 = por %p96, %p97
      %p100 = scmp.ne.s32.totalorder %s85, %s99
      %p101 = scmp.eq.s32.totalorder %s33, 0
      %p102 = por %p100, %p101
      %s104 = sadd.s32 %s103, 1
      %p107 = scmp.eq.s32.totalorder %s27, 1
      %p108 = scmp.ne.s32.totalorder %s103, %s105
      %p109 = scmp.eq.s32.totalorder %s27, 0
      %p110 = por %p108, %p109
      %p111 = scmp.ne.s32.totalorder %s103, %s105
      %p112 = scmp.eq.s32.totalorder %s32, 1
      %p113 = por %p111, %p112
      %p114 = scmp.ne.s32.totalorder %s105, %s106
      %p115 = scmp.eq.s32.totalorder %s32, 0
      %p116 = por %p114, %p115
      %p117 = scmp.ne.s32.totalorder %s105, %s106
      %p118 = scmp.eq.s32.totalorder %s33, 1
      %p119 = por %p117, %p118
      %p121 = scmp.ne.s32.totalorder %s106, %s120
      %p122 = scmp.eq.s32.totalorder %s33, 0
      %p123 = por %p121, %p122
      %s125 = sadd.s32 %s124, 1
      %p128 = scmp.eq.s32.totalorder %s27, 1
      %p129 = scmp.ne.s32.totalorder %s124, %s126
      %p130 = scmp.eq.s32.totalorder %s27, 0
      %p131 = por %p129, %p130
      %p132 = scmp.ne.s32.totalorder %s124, %s126
      %p133 = scmp.eq.s32.totalorder %s32, 1
      %p134 = por %p132, %p133
      %p135 = scmp.ne.s32.totalorder %s126, %s127
      %p136 = scmp.eq.s32.totalorder %s32, 0
      %p137 = por %p135, %p136
      %p138 = scmp.ne.s32.totalorder %s126, %s127
      %p139 = scmp.eq.s32.totalorder %s33, 1
      %p140 = por %p138, %p139
      %p142 = scmp.ne.s32.totalorder %s127, %s141
      %p143 = scmp.eq.s32.totalorder %s33, 0
      %p144 = por %p142, %p143
      %s146 = sadd.s32 %s145, 1
      %p149 = scmp.eq.s32.totalorder %s27, 1
      %p150 = scmp.ne.s32.totalorder %s145, %s147
      %p151 = scmp.eq.s32.totalorder %s27, 0
      %p152 = por %p150, %p151
      %p153 = scmp.ne.s32.totalorder %s145, %s147
      %p154 = scmp.eq.s32.totalorder %s32, 1
      %p155 = por %p153, %p154
      %p156 = scmp.ne.s32.totalorder %s147, %s148
      %p157 = scmp.eq.s32.totalorder %s32, 0
      %p158 = por %p156, %p157
      %p159 = scmp.ne.s32.totalorder %s147, %s148
      %p160 = scmp.eq.s32.totalorder %s33, 1
      %p161 = por %p159, %p160
      %p163 = scmp.ne.s32.totalorder %s148, %s162
      %p164 = scmp.eq.s32.totalorder %s33, 0
      %p165 = por %p163, %p164
      %s167 = sadd.s32 %s166, 1
      %p170 = scmp.eq.s32.totalorder %s27, 1
      %p171 = scmp.ne.s32.totalorder %s166, %s168
      %p172 = scmp.eq.s32.totalorder %s27, 0
      %p173 = por %p171, %p172
      %p174 = scmp.ne.s32.totalorder %s166, %s168
      %p175 = scmp.eq.s32.totalorder %s32, 1
      %p176 = por %p174, %p175
      %p177 = scmp.ne.s32.totalorder %s168, %s169
      %p178 = scmp.eq.s32.totalorder %s32, 0
      %p179 = por %p177, %p178
      %p180 = scmp.ne.s32.totalorder %s168, %s169
      %p181 = scmp.eq.s32.totalorder %s33, 1
      %p182 = por %p180, %p181
      %p184 = scmp.ne.s32.totalorder %s169, %s183
      %p185 = scmp.eq.s32.totalorder %s33, 0
      %p186 = por %p184, %p185
      %s188 = sadd.s32 %s187, 1
      %p191 = scmp.eq.s32.totalorder %s27, 1
      %p192 = scmp.ne.s32.totalorder %s187, %s189
      %p193 = scmp.eq.s32.totalorder %s27, 0
      %p194 = por %p192, %p193
      %p195 = scmp.ne.s32.totalorder %s187, %s189
      %p196 = scmp.eq.s32.totalorder %s32, 1
      %p197 = por %p195, %p196
      %p198 = scmp.ne.s32.totalorder %s189, %s190
      %p199 = scmp.eq.s32.totalorder %s32, 0
      %p200 = por %p198, %p199
      %p201 = scmp.ne.s32.totalorder %s189, %s190
      %p202 = scmp.eq.s32.totalorder %s33, 1
      %p203 = por %p201, %p202
      %p205 = scmp.ne.s32.totalorder %s190, %s204
      %p206 = scmp.eq.s32.totalorder %s33, 0
      %p207 = por %p205, %p206
      %s209 = sadd.s32 %s208, 1
      %p212 = scmp.eq.s32.totalorder %s27, 1
      %p213 = scmp.ne.s32.totalorder %s208, %s210
      %p214 = scmp.eq.s32.totalorder %s27, 0
      %p215 = por %p213, %p214
      %p216 = scmp.ne.s32.totalorder %s208, %s210
      %p217 = scmp.eq.s32.totalorder %s32, 1
      %p218 = por %p216, %p217
      %p219 = scmp.ne.s32.totalorder %s210, %s211
      %p220 = scmp.eq.s32.totalorder %s32, 0
      %p221 = por %p219, %p220
      %p222 = scmp.ne.s32.totalorder %s210, %s211
      %p223 = scmp.eq.s32.totalorder %s33, 1
      %p224 = por %p222, %p223
      %p226 = scmp.ne.s32.totalorder %s211, %s225
      %p227 = scmp.eq.s32.totalorder %s33, 0
      %p228 = por %p226, %p227
      %s229 = ssub.s32 %s27, %s34
      %p230 = scmp.eq.s32.totalorder %s229, 0
      %s232 = sadd.s32 %s231, 1
      %s233 = scalar_select %p230, %s231, %s232
      %p236 = pneg %p230
      %p237 = scmp.eq.s32.totalorder %s27, 1
      %p238 = por %p236, %p237
      %p239 = scmp.ne.s32.totalorder %s231, %s234
      %p240 = scmp.eq.s32.totalorder %s27, 0
      %p241 = por %p239, %p240
      %p242 = scmp.ne.s32.totalorder %s231, %s234
      %p243 = scmp.eq.s32.totalorder %s32, 1
      %p244 = por %p242, %p243
      %p245 = scmp.ne.s32.totalorder %s234, %s235
      %p246 = scmp.eq.s32.totalorder %s32, 0
      %p247 = por %p245, %p246
      %p248 = scmp.ne.s32.totalorder %s234, %s235
      %p249 = scmp.eq.s32.totalorder %s33, 1
      %p250 = por %p248, %p249
      %p252 = scmp.ne.s32.totalorder %s235, %s251
      %p253 = scmp.eq.s32.totalorder %s33, 0
      %p254 = por %p252, %p253
      %s255 = ssub.s32 %s27, %s34
      %p256 = scmp.eq.s32.totalorder %s255, 0
      %s258 = sadd.s32 %s257, 1
      %s259 = scalar_select %p256, %s257, %s258
      %p262 = pneg %p256
      %p263 = scmp.eq.s32.totalorder %s27, 1
      %p264 = por %p262, %p263
      %p265 = scmp.ne.s32.totalorder %s257, %s260
      %p266 = scmp.eq.s32.totalorder %s27, 0
      %p267 = por %p265, %p266
      %p268 = scmp.ne.s32.totalorder %s257, %s260
      %p269 = scmp.eq.s32.totalorder %s32, 1
      %p270 = por %p268, %p269
      %p271 = scmp.ne.s32.totalorder %s260, %s261
      %p272 = scmp.eq.s32.totalorder %s32, 0
      %p273 = por %p271, %p272
      %p274 = scmp.ne.s32.totalorder %s260, %s261
      %p275 = scmp.eq.s32.totalorder %s33, 1
      %p276 = por %p274, %p275
      %p278 = scmp.ne.s32.totalorder %s261, %s277
      %p279 = scmp.eq.s32.totalorder %s33, 0
      %p280 = por %p278, %p279
      %p281 = scmp.le.s32.totalorder 1, %s27
      %p282 = scmp.lt.s32.totalorder %s27, 3
      %p283 = pnand %p281, %p282
      %p284 = pneg %p283
      // Predicated region
      $region9: #{tpu_custom_call.1} parent=5 // pred_check
        _
      $region10: #{tpu_custom_call.1} parent=5 // pred_check_branch
        %286 = sbr.rel (%p283) target = $region12
      $region11: #{tpu_custom_call.1} parent=5 // pred_region
        %s287 = ssub.s32 %s27, 1
        // Predicated region
        $region13: #{tpu_custom_call.1} parent=11 // pred_check
          %p288 = pneg %p74
        $region14: #{tpu_custom_call.1} parent=11 // pred_check_branch
          %290 = sbr.rel (%p288) target = $region16
        $region15: #{tpu_custom_call.1} parent=11 // pred_region
          %292 = vsyncadd [#allocation6], 0
          %s293 = sshll.u32 %s1, 4
          %s294 = int_to_ptr.hbm [resolvable:$true] %s293
          %s295 = sshll.u32 [#allocation5], 4
          %s296 = int_to_ptr.vmem [resolvable:$true] %s295
          %301 = dma.hbm_to_vmem [thread:$0]  %s294, 1536, %s296, [#allocation6], 64, 64, 4
        $region16: #{tpu_custom_call.1} parent=11 // pred_fallthru
          _
        // Predicated region
        $region17: #{tpu_custom_call.1} parent=11 // pred_check
          %p302 = pneg %p95
        $region18: #{tpu_custom_call.1} parent=11 // pred_check_branch
          %304 = sbr.rel (%p302) target = $region20
        $region19: #{tpu_custom_call.1} parent=11 // pred_region
          _
        $region20: #{tpu_custom_call.1} parent=11 // pred_fallthru
          _
        // Predicated region
        $region21: #{tpu_custom_call.1} parent=11 // pred_check
          %p305 = pneg %p116
        $region22: #{tpu_custom_call.1} parent=11 // pred_check_branch
          %307 = sbr.rel (%p305) target = $region24
        $region23: #{tpu_custom_call.1} parent=11 // pred_region
          _
        $region24: #{tpu_custom_call.1} parent=11 // pred_fallthru
          _
        // Predicated region
        $region25: #{tpu_custom_call.1} parent=11 // pred_check
          %p308 = pneg %p137
        $region26: #{tpu_custom_call.1} parent=11 // pred_check_branch
          %310 = sbr.rel (%p308) target = $region28
        $region27: #{tpu_custom_call.1} parent=11 // pred_region
          _
        $region28: #{tpu_custom_call.1} parent=11 // pred_fallthru
          _
        // Predicated region
        $region29: #{tpu_custom_call.1} parent=11 // pred_check
          %p311 = pneg %p158
        $region30: #{tpu_custom_call.1} parent=11 // pred_check_branch
          %313 = sbr.rel (%p311) target = $region32
        $region31: #{tpu_custom_call.1} parent=11 // pred_region
          _
        $region32: #{tpu_custom_call.1} parent=11 // pred_fallthru
          _
        // Predicated region
        $region33: #{tpu_custom_call.1} parent=11 // pred_check
          %p314 = pneg %p179
        $region34: #{tpu_custom_call.1} parent=11 // pred_check_branch
          %316 = sbr.rel (%p314) target = $region36
        $region35: #{tpu_custom_call.1} parent=11 // pred_region
          _
        $region36: #{tpu_custom_call.1} parent=11 // pred_fallthru
          _
        // Predicated region
        $region37: #{tpu_custom_call.1} parent=11 // pred_check
          %p317 = pneg %p200
        $region38: #{tpu_custom_call.1} parent=11 // pred_check_branch
          %319 = sbr.rel (%p317) target = $region40
        $region39: #{tpu_custom_call.1} parent=11 // pred_region
          _
        $region40: #{tpu_custom_call.1} parent=11 // pred_fallthru
          _
        // Predicated region
        $region41: #{tpu_custom_call.1} parent=11 // pred_check
          %p320 = pneg %p221
        $region42: #{tpu_custom_call.1} parent=11 // pred_check_branch
          %322 = sbr.rel (%p320) target = $region44
        $region43: #{tpu_custom_call.1} parent=11 // pred_region
          %324 = vsyncadd [#allocation6], 0
          %s325 = sshll.u32 %s8, 4
          %s326 = int_to_ptr.hbm [resolvable:$true] %s325
          %s327 = sshll.u32 [#allocation7], 4
          %s328 = int_to_ptr.vmem [resolvable:$true] %s327
          %333 = dma.hbm_to_vmem [thread:$0]  %s326, 128, %s328, [#allocation6], 64, 64, 4
        $region44: #{tpu_custom_call.1} parent=11 // pred_fallthru
          _
      $region12: #{tpu_custom_call.1} parent=5 // pred_fallthru
        _
      %p334 = scmp.lt.s32.totalorder %s27, 2
      // Predicated region
      $region45: #{tpu_custom_call.1} parent=5 // pred_check
        %p335 = pneg %p334
      $region46: #{tpu_custom_call.1} parent=5 // pred_check_branch
        %337 = sbr.rel (%p335) target = $region48
      $region47: #{tpu_custom_call.1} parent=5 // pred_region
        // Predicated region
        $region49: #{tpu_custom_call.1} parent=47 // pred_check
          %p338 = pneg %p47
        $region50: #{tpu_custom_call.1} parent=47 // pred_check_branch
          %340 = sbr.rel (%p338) target = $region52
        $region51: #{tpu_custom_call.1} parent=47 // pred_region
          %s341 = sand.u32 %s37, 1
          %s342 = scalar_lea.sflag [#allocation3], %s341
          %s343 = sand.u32 %s37, 1
          %s344 = smul.addr %s343, 8
          %s345 = scalar_lea.vmem [#allocation2], %s344
          %347 = vsyncadd %s342, 0
          %s348 = smul.addr %s27, 2
          %s349 = smul.addr %s348, 4
          %s350 = scalar_lea.hbm %s0, %s349
          %s351 = sshll.u32 %s350, 4
          %s352 = int_to_ptr.hbm [resolvable:$true] %s351
          %s353 = sshll.u32 %s345, 4
          %s354 = int_to_ptr.vmem [resolvable:$true] %s353
          %359 = dma.hbm_to_vmem [thread:$0]  %s352, 128, %s354, %s342, 64, 64, 4
        $region52: #{tpu_custom_call.1} parent=47 // pred_fallthru
          _
      $region48: #{tpu_custom_call.1} parent=5 // pred_fallthru
        _
      %p360 = scmp.le.s32.totalorder 1, %s27
      %p361 = scmp.lt.s32.totalorder %s27, 3
      %p362 = pnand %p360, %p361
      %p363 = pneg %p362
      // Predicated region
      $region53: #{tpu_custom_call.1} parent=5 // pred_check
        _
      $region54: #{tpu_custom_call.1} parent=5 // pred_check_branch
        %365 = sbr.rel (%p362) target = $region56
      $region55: #{tpu_custom_call.1} parent=5 // pred_region
        %s366 = ssub.s32 %s27, 1
        %s367 = sand.u32 %s40, 1
        %s368 = scalar_lea.sflag [#allocation3], %s367
        %s369 = sand.u32 %s40, 1
        %s370 = smul.addr %s369, 8
        %s371 = scalar_lea.vmem [#allocation2], %s370
        // Predicated region
        $region57: #{tpu_custom_call.1} parent=55 // pred_check
          %p372 = pneg %p53
        $region58: #{tpu_custom_call.1} parent=55 // pred_check_branch
          %374 = sbr.rel (%p372) target = $region60
        $region59: #{tpu_custom_call.1} parent=55 // pred_region
          %376 = dma.done %s368, 128
        $region60: #{tpu_custom_call.1} parent=55 // pred_fallthru
          _
        // Predicated region
        $region61: #{tpu_custom_call.1} parent=55 // pred_check
          %p377 = pneg %p74
        $region62: #{tpu_custom_call.1} parent=55 // pred_check_branch
          %379 = sbr.rel (%p377) target = $region64
        $region63: #{tpu_custom_call.1} parent=55 // pred_region
          %381 = dma.done [#allocation6], 1536
        $region64: #{tpu_custom_call.1} parent=55 // pred_fallthru
          _
        // Predicated region
        $region65: #{tpu_custom_call.1} parent=55 // pred_check
          %p382 = pneg %p221
        $region66: #{tpu_custom_call.1} parent=55 // pred_check_branch
          %384 = sbr.rel (%p382) target = $region68
        $region67: #{tpu_custom_call.1} parent=55 // pred_region
          %386 = dma.done [#allocation6], 128
        $region68: #{tpu_custom_call.1} parent=55 // pred_fallthru
          _
        %s387 = sand.u32 %s40, 1
        %s388 = scalar_lea.sflag [#allocation3], %s387
        %s389 = sand.u32 %s40, 1
        %s390 = smul.addr %s389, 8
        %s391 = scalar_lea.vmem [#allocation2], %s390
        %p392 = pneg %p53
        %p393 = pneg %p50
        %p394 = pneg %p74
        %p395 = pneg %p71
        %p396 = pneg %p95
        %p397 = pneg %p92
        %p398 = pneg %p116
        %p399 = pneg %p113
        %p400 = pneg %p137
        %p401 = pneg %p134
        %p402 = pneg %p158
        %p403 = pneg %p155
        %p404 = pneg %p179
        %p405 = pneg %p176
        %p406 = pneg %p200
        %p407 = pneg %p197
        %p408 = pneg %p221
        %p409 = pneg %p218
        %p410 = pneg %p247
        %p411 = pneg %p244
        %s412 = sand.u32 %s234, 1
        %s413 = scalar_lea.sflag [#allocation4], %s412
        %s414 = sand.u32 %s234, 1
        %s415 = smul.addr %s414, 4
        %s416 = scalar_lea.vmem [#allocation8], %s415
        %p417 = pneg %p273
        %p418 = pneg %p270
        %s419 = sand.u32 %s260, 1
        %s420 = scalar_lea.sflag [#allocation10], %s419
        %s421 = sand.u32 %s260, 1
        %s422 = smul.addr %s421, 16
        %s423 = scalar_lea.vmem [#allocation9], %s422
        %v425 = vld [vmem:[%s371] sm:$0xf]
        %v426 = vld [vmem:[%s371 + $0x4] sm:$0xf]
        %v429 = vunpack.c.l.b16 %v425
        %v430 = vunpack.c.l.b16 %v426
        %v431 = vpack.c.b16 %v430, %v429
        %v433 = vshrl.u32 %v431, 16
        %v435 = vrot.slane %v433, 7
        %v436 = vshll.u32 %v431, 16
        %v438 = vor.u32 %v435, %v436
        %vm440 = vcmask 1040384
        %vm441 = vsmask.f32 256
        %vm442 = vmand %vm440, %vm441
        %v443 = vsel %vm442, 0, %v438
        %v444 = vrot.slane %v436, 1
        %v445 = vor.u32 %v433, %v444
        %vm447 = vcmask 1047552
        %vm448 = vsmask.f32 7424
        %vm449 = vmand %vm447, %vm448
        %v450 = vsel %vm449, %v445, 0
        %451 = vrot.lane.b32.xlu0 %v431, 64
        %v452 = vpop.permute.xlu0 %451
        %vm453 = vcmask 523264
        %v456 = vsel %vm453, %v443, %v452
        %v458 = vld [vmem:[#allocation5] sm:$0xf]
        %v459 = vld [vmem:[#allocation5 + $0x4] sm:$0xf]
        %v460 = vld [vmem:[#allocation5 + $0x8] sm:$0xf]
        %v461 = vld [vmem:[#allocation5 + $0xc] sm:$0xf]
        %v462 = vld [vmem:[#allocation5 + $0x10] sm:$0xf]
        %v463 = vld [vmem:[#allocation5 + $0x14] sm:$0xf]
        %v464 = vld [vmem:[#allocation5 + $0x18] sm:$0xf]
        %v465 = vld [vmem:[#allocation5 + $0x1c] sm:$0xf]
        %v466 = vld [vmem:[#allocation5 + $0x20] sm:$0xf]
        %v467 = vld [vmem:[#allocation5 + $0x24] sm:$0xf]
        %v468 = vld [vmem:[#allocation5 + $0x28] sm:$0xf]
        %v469 = vld [vmem:[#allocation5 + $0x2c] sm:$0xf]
        %v470 = vld [vmem:[#allocation5 + $0x30] sm:$0xf]
        %v471 = vld [vmem:[#allocation5 + $0x34] sm:$0xf]
        %v472 = vld [vmem:[#allocation5 + $0x38] sm:$0xf]
        %v473 = vld [vmem:[#allocation5 + $0x3c] sm:$0xf]
        %v474 = vld [vmem:[#allocation5 + $0x40] sm:$0xf]
        %v475 = vld [vmem:[#allocation5 + $0x44] sm:$0xf]
        %v476 = vld [vmem:[#allocation5 + $0x48] sm:$0xf]
        %v477 = vld [vmem:[#allocation5 + $0x4c] sm:$0xf]
        %v478 = vld [vmem:[#allocation5 + $0x50] sm:$0xf]
        %v479 = vld [vmem:[#allocation5 + $0x54] sm:$0xf]
        %v480 = vld [vmem:[#allocation5 + $0x58] sm:$0xf]
        %v481 = vld [vmem:[#allocation5 + $0x5c] sm:$0xf]
        %v506 = vunpack.c.l.b16 %v458
        %v507 = vunpack.c.l.b16 %v459
        %v508 = vunpack.c.l.b16 %v460
        %v509 = vunpack.c.l.b16 %v461
        %v510 = vunpack.c.l.b16 %v462
        %v511 = vunpack.c.l.b16 %v463
        %v512 = vunpack.c.l.b16 %v464
        %v513 = vunpack.c.l.b16 %v465
        %v514 = vunpack.c.l.b16 %v466
        %v515 = vunpack.c.l.b16 %v467
        %v516 = vunpack.c.l.b16 %v468
        %v517 = vunpack.c.l.b16 %v469
        %v518 = vunpack.c.l.b16 %v470
        %v519 = vunpack.c.l.b16 %v471
        %v520 = vunpack.c.l.b16 %v472
        %v521 = vunpack.c.l.b16 %v473
        %v522 = vunpack.c.l.b16 %v474
        %v523 = vunpack.c.l.b16 %v475
        %v524 = vunpack.c.l.b16 %v476
        %v525 = vunpack.c.l.b16 %v477
        %v526 = vunpack.c.l.b16 %v478
        %v527 = vunpack.c.l.b16 %v479
        %v528 = vunpack.c.l.b16 %v480
        %v529 = vunpack.c.l.b16 %v481
        %v530 = vpack.c.b16 %v507, %v506
        %v531 = vpack.c.b16 %v509, %v508
        %v532 = vpack.c.b16 %v511, %v510
        %v533 = vpack.c.b16 %v513, %v512
        %v534 = vpack.c.b16 %v515, %v514
        %v535 = vpack.c.b16 %v517, %v516
        %v536 = vpack.c.b16 %v519, %v518
        %v537 = vpack.c.b16 %v521, %v520
        %v538 = vpack.c.b16 %v523, %v522
        %v539 = vpack.c.b16 %v525, %v524
        %v540 = vpack.c.b16 %v527, %v526
        %v541 = vpack.c.b16 %v529, %v528
        %v555 = vsel %vm453, %v450, 0
        %557 = vmatpush.bf16.msra.mxu0 %v537
        %558 = vmatpush.bf16.msra.mxu0 %v536
        %559 = vmatpush.bf16.msra.mxu0 %v535
        %560 = vmatpush.bf16.msra.mxu0 %v534
        %561 = vmatpush.bf16.msra.mxu0 %v533
        %562 = vmatpush.bf16.msra.mxu0 %v532
        %563 = vmatpush.bf16.msra.mxu0 %v531
        %564 = vmatpush.bf16.msra.mxu0 %v530
        %565 = vmatmul.bf16.gmra.mxu0 %v456
        %v566 = vpop.f32.mrf.mxu0
        %v567 = vadd.f32 0.0, %v566
        %v568 = vpop.f32.mrf.mxu0
        %v569 = vadd.f32 0.0, %v568
        %570 = vdwg.mxu0
        %571 = vmatpush.bf16.msra.mxu0 0
        %572 = vmatpush.bf16.msra.mxu0 0
        %573 = vmatpush.bf16.msra.mxu0 0
        %574 = vmatpush.bf16.msra.mxu0 0
        %575 = vmatpush.bf16.msra.mxu0 %v541
        %576 = vmatpush.bf16.msra.mxu0 %v540
        %577 = vmatpush.bf16.msra.mxu0 %v539
        %578 = vmatpush.bf16.msra.mxu0 %v538
        %579 = vmatmul.bf16.gmra.mxu0 %v555
        %v580 = vpop.f32.mrf.mxu0
        %v581 = vadd.f32 %v567, %v580
        %v582 = vpop.f32.mrf.mxu0
        %v583 = vadd.f32 %v569, %v582
        %584 = vdwg.mxu0
        %v585 = vld [vmem:[%s2] sm:$0x1]
        %v587 = vperm.slane %v585, 0
        %v589 = vmul.f32 %v581, %v587
        %v590 = vmul.f32 %v583, %v587
        %v591 = vld [vmem:[%s3] sm:$0x1]
        %v593 = vperm.slane %v591, 0
        %v595 = vadd.f32 %v589, %v593
        %v596 = vadd.f32 %v590, %v593
        %vm597 = vcmp.ge.f32.partialorder %v595, 0.0
        %vm598 = vcmp.ge.f32.partialorder %v596, 0.0
        %v599 = vmul.f32 %v595, 0.1
        %v600 = vmul.f32 %v596, 0.1
        %v601 = vsel %vm597, %v595, %v599
        %v602 = vsel %vm598, %v596, %v600
        %v603 = vpack.c.bf16 %v601, %v601
        %v604 = vpack.c.bf16 %v602, %v602
        %v607 = vunpack.c.l.b16 %v603
        %v608 = vunpack.c.l.b16 %v604
        %v609 = vpack.c.b16 %v608, %v607
        %v611 = vshrl.u32 %v609, 16
        %v613 = vrot.slane %v611, 7
        %v614 = vshll.u32 %v609, 16
        %v616 = vor.u32 %v613, %v614
        %v618 = vsel %vm442, 0, %v616
        %v619 = vrot.slane %v614, 1
        %v620 = vor.u32 %v611, %v619
        %v622 = vsel %vm449, %v620, 0
        %v624 = vld [vmem:[%s4] sm:$0xf]
        %v625 = vld [vmem:[%s4 + $0x4] sm:$0xf]
        %v626 = vld [vmem:[%s4 + $0x8] sm:$0xf]
        %v627 = vld [vmem:[%s4 + $0xc] sm:$0xf]
        %v628 = vld [vmem:[%s4 + $0x10] sm:$0xf]
        %v629 = vld [vmem:[%s4 + $0x14] sm:$0xf]
        %v630 = vld [vmem:[%s4 + $0x18] sm:$0xf]
        %v631 = vld [vmem:[%s4 + $0x1c] sm:$0xf]
        %v632 = vld [vmem:[%s4 + $0x20] sm:$0xf]
        %v633 = vld [vmem:[%s4 + $0x24] sm:$0xf]
        %v634 = vld [vmem:[%s4 + $0x28] sm:$0xf]
        %v635 = vld [vmem:[%s4 + $0x2c] sm:$0xf]
        %v636 = vld [vmem:[%s4 + $0x30] sm:$0xf]
        %v637 = vld [vmem:[%s4 + $0x34] sm:$0xf]
        %v638 = vld [vmem:[%s4 + $0x38] sm:$0xf]
        %v639 = vld [vmem:[%s4 + $0x3c] sm:$0xf]
        %v640 = vld [vmem:[%s4 + $0x40] sm:$0xf]
        %v641 = vld [vmem:[%s4 + $0x44] sm:$0xf]
        %v642 = vld [vmem:[%s4 + $0x48] sm:$0xf]
        %v643 = vld [vmem:[%s4 + $0x4c] sm:$0xf]
        %v644 = vld [vmem:[%s4 + $0x50] sm:$0xf]
        %v645 = vld [vmem:[%s4 + $0x54] sm:$0xf]
        %v646 = vld [vmem:[%s4 + $0x58] sm:$0xf]
        %v647 = vld [vmem:[%s4 + $0x5c] sm:$0xf]
        %v648 = vld [vmem:[%s4 + $0x60] sm:$0xf]
        %v649 = vld [vmem:[%s4 + $0x64] sm:$0xf]
        %v650 = vld [vmem:[%s4 + $0x68] sm:$0xf]
        %v651 = vld [vmem:[%s4 + $0x6c] sm:$0xf]
        %v652 = vld [vmem:[%s4 + $0x70] sm:$0xf]
        %v653 = vld [vmem:[%s4 + $0x74] sm:$0xf]
        %v654 = vld [vmem:[%s4 + $0x78] sm:$0xf]
        %v655 = vld [vmem:[%s4 + $0x7c] sm:$0xf]
        %v656 = vld [vmem:[%s4 + $0x80] sm:$0xf]
        %v657 = vld [vmem:[%s4 + $0x84] sm:$0xf]
        %v658 = vld [vmem:[%s4 + $0x88] sm:$0xf]
        %v659 = vld [vmem:[%s4 + $0x8c] sm:$0xf]
        %v660 = vld [vmem:[%s4 + $0x90] sm:$0xf]
        %v661 = vld [vmem:[%s4 + $0x94] sm:$0xf]
        %v662 = vld [vmem:[%s4 + $0x98] sm:$0xf]
        %v663 = vld [vmem:[%s4 + $0x9c] sm:$0xf]
        %v664 = vld [vmem:[%s4 + $0xa0] sm:$0xf]
        %v665 = vld [vmem:[%s4 + $0xa4] sm:$0xf]
        %v666 = vld [vmem:[%s4 + $0xa8] sm:$0xf]
        %v667 = vld [vmem:[%s4 + $0xac] sm:$0xf]
        %v668 = vld [vmem:[%s4 + $0xb0] sm:$0xf]
        %v669 = vld [vmem:[%s4 + $0xb4] sm:$0xf]
        %v670 = vld [vmem:[%s4 + $0xb8] sm:$0xf]
        %v671 = vld [vmem:[%s4 + $0xbc] sm:$0xf]
        %v720 = vunpack.c.l.b16 %v624
        %v721 = vunpack.c.l.b16 %v625
        %v722 = vunpack.c.l.b16 %v626
        %v723 = vunpack.c.l.b16 %v627
        %v724 = vunpack.c.l.b16 %v628
        %v725 = vunpack.c.l.b16 %v629
        %v726 = vunpack.c.l.b16 %v630
        %v727 = vunpack.c.l.b16 %v631
        %v728 = vunpack.c.l.b16 %v632
        %v729 = vunpack.c.l.b16 %v633
        %v730 = vunpack.c.l.b16 %v634
        %v731 = vunpack.c.l.b16 %v635
        %v732 = vunpack.c.l.b16 %v636
        %v733 = vunpack.c.l.b16 %v637
        %v734 = vunpack.c.l.b16 %v638
        %v735 = vunpack.c.l.b16 %v639
        %v736 = vunpack.c.l.b16 %v640
        %v737 = vunpack.c.l.b16 %v641
        %v738 = vunpack.c.l.b16 %v642
        %v739 = vunpack.c.l.b16 %v643
        %v740 = vunpack.c.l.b16 %v644
        %v741 = vunpack.c.l.b16 %v645
        %v742 = vunpack.c.l.b16 %v646
        %v743 = vunpack.c.l.b16 %v647
        %v744 = vunpack.c.l.b16 %v648
        %v745 = vunpack.c.l.b16 %v649
        %v746 = vunpack.c.l.b16 %v650
        %v747 = vunpack.c.l.b16 %v651
        %v748 = vunpack.c.l.b16 %v652
        %v749 = vunpack.c.l.b16 %v653
        %v750 = vunpack.c.l.b16 %v654
        %v751 = vunpack.c.l.b16 %v655
        %v752 = vunpack.c.l.b16 %v656
        %v753 = vunpack.c.l.b16 %v657
        %v754 = vunpack.c.l.b16 %v658
        %v755 = vunpack.c.l.b16 %v659
        %v756 = vunpack.c.l.b16 %v660
        %v757 = vunpack.c.l.b16 %v661
        %v758 = vunpack.c.l.b16 %v662
        %v759 = vunpack.c.l.b16 %v663
        %v760 = vunpack.c.l.b16 %v664
        %v761 = vunpack.c.l.b16 %v665
        %v762 = vunpack.c.l.b16 %v666
        %v763 = vunpack.c.l.b16 %v667
        %v764 = vunpack.c.l.b16 %v668
        %v765 = vunpack.c.l.b16 %v669
        %v766 = vunpack.c.l.b16 %v670
        %v767 = vunpack.c.l.b16 %v671
        %v768 = vpack.c.b16 %v721, %v720
        %v769 = vpack.c.b16 %v723, %v722
        %v770 = vpack.c.b16 %v725, %v724
        %v771 = vpack.c.b16 %v727, %v726
        %v772 = vpack.c.b16 %v729, %v728
        %v773 = vpack.c.b16 %v731, %v730
        %v774 = vpack.c.b16 %v733, %v732
        %v775 = vpack.c.b16 %v735, %v734
        %v776 = vpack.c.b16 %v737, %v736
        %v777 = vpack.c.b16 %v739, %v738
        %v778 = vpack.c.b16 %v741, %v740
        %v779 = vpack.c.b16 %v743, %v742
        %v780 = vpack.c.b16 %v745, %v744
        %v781 = vpack.c.b16 %v747, %v746
        %v782 = vpack.c.b16 %v749, %v748
        %v783 = vpack.c.b16 %v751, %v750
        %v784 = vpack.c.b16 %v753, %v752
        %v785 = vpack.c.b16 %v755, %v754
        %v786 = vpack.c.b16 %v757, %v756
        %v787 = vpack.c.b16 %v759, %v758
        %v788 = vpack.c.b16 %v761, %v760
        %v789 = vpack.c.b16 %v763, %v762
        %v790 = vpack.c.b16 %v765, %v764
        %v791 = vpack.c.b16 %v767, %v766
        %816 = vmatpush.bf16.msra.mxu0 %v775
        %817 = vmatpush.bf16.msra.mxu0 %v774
        %818 = vmatpush.bf16.msra.mxu0 %v773
        %819 = vmatpush.bf16.msra.mxu0 %v772
        %820 = vmatpush.bf16.msra.mxu0 %v771
        %821 = vmatpush.bf16.msra.mxu0 %v770
        %822 = vmatpush.bf16.msra.mxu0 %v769
        %823 = vmatpush.bf16.msra.mxu0 %v768
        %824 = vmatmul.bf16.gmra.mxu0 %v618
        %v825 = vpop.f32.mrf.mxu0
        %v826 = vadd.f32 0.0, %v825
        %v827 = vpop.f32.mrf.mxu0
        %v828 = vadd.f32 0.0, %v827
        %829 = vdwg.mxu0
        %830 = vmatpush.bf16.msra.mxu0 %v783
        %831 = vmatpush.bf16.msra.mxu0 %v782
        %832 = vmatpush.bf16.msra.mxu0 %v781
        %833 = vmatpush.bf16.msra.mxu0 %v780
        %834 = vmatpush.bf16.msra.mxu0 %v779
        %835 = vmatpush.bf16.msra.mxu0 %v778
        %836 = vmatpush.bf16.msra.mxu0 %v777
        %837 = vmatpush.bf16.msra.mxu0 %v776
        %838 = vmatmul.bf16.gmra.mxu0 %v609
        %v839 = vpop.f32.mrf.mxu0
        %v840 = vadd.f32 %v826, %v839
        %v841 = vpop.f32.mrf.mxu0
        %v842 = vadd.f32 %v828, %v841
        %843 = vdwg.mxu0
        %844 = vmatpush.bf16.msra.mxu0 %v791
        %845 = vmatpush.bf16.msra.mxu0 %v790
        %846 = vmatpush.bf16.msra.mxu0 %v789
        %847 = vmatpush.bf16.msra.mxu0 %v788
        %848 = vmatpush.bf16.msra.mxu0 %v787
        %849 = vmatpush.bf16.msra.mxu0 %v786
        %850 = vmatpush.bf16.msra.mxu0 %v785
        %851 = vmatpush.bf16.msra.mxu0 %v784
        %852 = vmatmul.bf16.gmra.mxu0 %v622
        %v853 = vpop.f32.mrf.mxu0
        %v854 = vadd.f32 %v840, %v853
        %v855 = vpop.f32.mrf.mxu0
        %v856 = vadd.f32 %v842, %v855
        %857 = vdwg.mxu0
        %v858 = vld [vmem:[%s5] sm:$0x1]
        %v860 = vperm.slane %v858, 0
        %v862 = vmul.f32 %v854, %v860
        %v863 = vmul.f32 %v856, %v860
        %v864 = vld [vmem:[%s6] sm:$0x1]
        %v866 = vperm.slane %v864, 0
        %v868 = vadd.f32 %v862, %v866
        %v869 = vadd.f32 %v863, %v866
        %vm870 = vcmp.ge.f32.partialorder %v868, 0.0
        %vm871 = vcmp.ge.f32.partialorder %v869, 0.0
        %v872 = vmul.f32 %v868, 0.1
        %v873 = vmul.f32 %v869, 0.1
        %v874 = vsel %vm870, %v868, %v872
        %v875 = vsel %vm871, %v869, %v873
        %876 = vst [vmem:[%s423] sm:$0xff] %v874
        %877 = vst [vmem:[%s423 + $0x8] sm:$0xff] %v875
        %v878 = vld [vmem:[%s423] sm:$0xff]
        %v879 = vld [vmem:[%s423 + $0x8] sm:$0xff]
        %882 = vrot.lane.b32.xlu0 %v878, 120
        %v883 = vpop.permute.xlu0 %882
        %884 = vrot.lane.b32.xlu0 %v879, 120
        %v885 = vpop.permute.xlu0 %884
        %vm888 = vcmask 982016
        %v889 = vsel %vm888, %v883, 0.0
        %v890 = vsel %vm888, %v885, 0.0
        %v891 = vmax.f32 %v878, %v889
        %v892 = vmax.f32 %v879, %v890
        %vm895 = vcmask 1046528
        %v896 = vrot.slane %v891, 1
        %v897 = vrot.slane %v892, 1
        %v898 = vsel %vm895, %v896, %v897
        %v901 = vsel %vm895, %v897, 0.0
        %v902 = vmax.f32 %v891, %v898
        %v903 = vmax.f32 %v892, %v901
        %v904 = vld [vmem:[%s7] sm:$0xff]
        %v905 = vld [vmem:[%s7 + $0x8] sm:$0xff]
        %v906 = vld [vmem:[%s7 + $0x10] sm:$0xff]
        %v907 = vld [vmem:[%s7 + $0x18] sm:$0xff]
        %v908 = vld [vmem:[%s7 + $0x20] sm:$0xff]
        %v909 = vld [vmem:[%s7 + $0x28] sm:$0xff]
        %v910 = vld [vmem:[%s7 + $0x30] sm:$0xff]
        %v911 = vld [vmem:[%s7 + $0x38] sm:$0xff]
        %v912 = vld [vmem:[%s7 + $0x40] sm:$0xff]
        %v913 = vld [vmem:[%s7 + $0x48] sm:$0xff]
        %v914 = vld [vmem:[%s7 + $0x50] sm:$0xff]
        %v915 = vld [vmem:[%s7 + $0x58] sm:$0xff]
        %v916 = vld [vmem:[%s7 + $0x60] sm:$0xff]
        %v917 = vld [vmem:[%s7 + $0x68] sm:$0xff]
        %v918 = vld [vmem:[%s7 + $0x70] sm:$0xff]
        %v919 = vld [vmem:[%s7 + $0x78] sm:$0xff]
        %920 = vmatpush.msra.mxu0 %v919
        %921 = vmatpush.msra.mxu0 %v918
        %922 = vmatpush.msra.mxu0 %v917
        %923 = vmatpush.msra.mxu0 %v916
        %924 = vmatpush.msra.mxu0 %v915
        %925 = vmatpush.msra.mxu0 %v914
        %926 = vmatpush.msra.mxu0 %v913
        %927 = vmatpush.msra.mxu0 %v912
        %928 = vmatpush.msra.mxu0 %v911
        %929 = vmatpush.msra.mxu0 %v910
        %930 = vmatpush.msra.mxu0 %v909
        %931 = vmatpush.msra.mxu0 %v908
        %932 = vmatpush.msra.mxu0 %v907
        %933 = vmatpush.msra.mxu0 %v906
        %934 = vmatpush.msra.mxu0 %v905
        %935 = vmatpush.msra.mxu0 %v904
        %936 = vmatmul.f32.gmra.mxu0 %v902
        %v937 = vpop.f32.mrf.mxu0
        %v938 = vadd.f32 0.0, %v937
        %939 = vmatmul.f32.gmra.mxu0 %v903
        %v940 = vpop.f32.mrf.mxu0
        %v941 = vadd.f32 0.0, %v940
        %942 = vdwg.mxu0
        %v943 = vld [vmem:[#allocation7] sm:$0xf]
        %vm944 = vcmask 130048
        %v946 = vsel %vm944, %v943, 0
        %948 = vmatpush.msra.mxu0 0.0
        %949 = vmatpush.msra.mxu0 0.0
        %950 = vmatpush.msra.mxu0 0.0
        %951 = vmatpush.msra.mxu0 0.0
        %952 = vmatpush.msra.mxu0 0.0
        %953 = vmatpush.msra.mxu0 0.0
        %954 = vmatpush.msra.mxu0 0.0
        %955 = vmatpush.msra.mxu0 0.0
        %956 = vmatpush.msra.mxu0 0.0
        %957 = vmatpush.msra.mxu0 0.0
        %958 = vmatpush.msra.mxu0 0.0
        %959 = vmatpush.msra.mxu0 0.0
        %960 = vmatpush.msra.mxu0 0.0
        %961 = vmatpush.msra.mxu0 0.0
        %962 = vmatpush.msra.mxu0 %v941
        %963 = vmatpush.msra.mxu0 %v938
        %964 = vmatmul.f32.gmra.mxu0 %v946
        %v965 = vpop.f32.mrf.mxu0
        %v966 = vadd.f32 0.0, %v965
        %967 = vdwg.mxu0
        %s968 = scalar_lea.vmem [#allocation7], 4
        %v969 = vld [vmem:[%s968] sm:$0xf]
        %v971 = vsel %vm944, %v969, 0
        %973 = vmatpush.msra.mxu0 0.0
        %974 = vmatpush.msra.mxu0 0.0
        %975 = vmatpush.msra.mxu0 0.0
        %976 = vmatpush.msra.mxu0 0.0
        %977 = vmatpush.msra.mxu0 0.0
        %978 = vmatpush.msra.mxu0 0.0
        %979 = vmatpush.msra.mxu0 0.0
        %980 = vmatpush.msra.mxu0 0.0
        %981 = vmatpush.msra.mxu0 0.0
        %982 = vmatpush.msra.mxu0 0.0
        %983 = vmatpush.msra.mxu0 0.0
        %984 = vmatpush.msra.mxu0 0.0
        %985 = vmatpush.msra.mxu0 0.0
        %986 = vmatpush.msra.mxu0 0.0
        %987 = vmatpush.msra.mxu0 %v941
        %988 = vmatpush.msra.mxu0 %v938
        %989 = vmatmul.f32.gmra.mxu0 %v971
        %v990 = vpop.f32.mrf.mxu0
        %v991 = vadd.f32 0.0, %v990
        %992 = vdwg.mxu0
        %994 = vrot.lane.b32.xlu0 %v991, 64
        %v995 = vpop.permute.xlu0 %994
        %v997 = vsel %vm453, %v966, %v995
        %998 = vst [vmem:[%s416] sm:$0xf] %v997
        %s999 = sand.u32 %s234, 1
        %s1000 = scalar_lea.sflag [#allocation4], %s999
        %s1001 = sand.u32 %s234, 1
        %s1002 = smul.addr %s1001, 4
        %s1003 = scalar_lea.vmem [#allocation8], %s1002
        %s1004 = sand.u32 %s260, 1
        %s1005 = scalar_lea.sflag [#allocation10], %s1004
        %s1006 = sand.u32 %s260, 1
        %s1007 = smul.addr %s1006, 16
        %s1008 = scalar_lea.vmem [#allocation9], %s1007
        // Predicated region
        $region69: #{tpu_custom_call.1} parent=55 // pred_check
          %p1009 = pneg %p244
        $region70: #{tpu_custom_call.1} parent=55 // pred_check_branch
          %1011 = sbr.rel (%p1009) target = $region72
        $region71: #{tpu_custom_call.1} parent=55 // pred_region
          %1013 = vsyncadd %s1000, 0
          %s1014 = smul.addr %s32, 4
          %s1015 = scalar_lea.hbm %s9, %s1014
          %s1017 = sshll.u32 %s1003, 4
          %s1018 = int_to_ptr.vmem [resolvable:$true] %s1017
          %s1019 = sshll.u32 %s1015, 4
          %s1020 = int_to_ptr.hbm [resolvable:$true] %s1019
          %1022 = dma.vmem_to_hbm [thread:$0]  %s1018, 64, %s1020, %s1000
        $region72: #{tpu_custom_call.1} parent=55 // pred_fallthru
          _
        // Predicated region
        $region73: #{tpu_custom_call.1} parent=55 // pred_check
          %p1023 = pneg %p270
        $region74: #{tpu_custom_call.1} parent=55 // pred_check_branch
          %1025 = sbr.rel (%p1023) target = $region76
        $region75: #{tpu_custom_call.1} parent=55 // pred_region
          %1027 = vsyncadd %s1005, 0
          %s1028 = smul.addr %s32, 2
          %s1029 = smul.addr %s1028, 8
          %s1030 = scalar_lea.hbm %s10, %s1029
          %s1031 = sshll.u32 %s1008, 4
          %s1032 = int_to_ptr.vmem [resolvable:$true] %s1031
          %s1033 = sshll.u32 %s1030, 4
          %s1034 = int_to_ptr.hbm [resolvable:$true] %s1033
          %1039 = dma.vmem_to_hbm [thread:$0]  %s1032, 256, %s1034, %s1005, 128, 128, 8
        $region76: #{tpu_custom_call.1} parent=55 // pred_fallthru
          _
      $region56: #{tpu_custom_call.1} parent=5 // pred_fallthru
        _
      %p1040 = scmp.le.s32.totalorder 2, %s27
      // Predicated region
      $region77: #{tpu_custom_call.1} parent=5 // pred_check
        %p1041 = pneg %p1040
      $region78: #{tpu_custom_call.1} parent=5 // pred_check_branch
        %1043 = sbr.rel (%p1041) target = $region80
      $region79: #{tpu_custom_call.1} parent=5 // pred_region
        %s1044 = ssub.s32 %s27, 2
        // Predicated region
        $region81: #{tpu_custom_call.1} parent=79 // pred_check
          %p1045 = pneg %p250
        $region82: #{tpu_custom_call.1} parent=79 // pred_check_branch
          %1047 = sbr.rel (%p1045) target = $region84
        $region83: #{tpu_custom_call.1} parent=79 // pred_region
          %s1048 = sand.u32 %s235, 1
          %s1049 = scalar_lea.sflag [#allocation4], %s1048
          %s1050 = sand.u32 %s235, 1
          %s1051 = smul.addr %s1050, 4
          %s1052 = scalar_lea.vmem [#allocation8], %s1051
          %1054 = dma.done %s1049, 64
        $region84: #{tpu_custom_call.1} parent=79 // pred_fallthru
          _
        // Predicated region
        $region85: #{tpu_custom_call.1} parent=79 // pred_check
          %p1055 = pneg %p276
        $region86: #{tpu_custom_call.1} parent=79 // pred_check_branch
          %1057 = sbr.rel (%p1055) target = $region88
        $region87: #{tpu_custom_call.1} parent=79 // pred_region
          %s1058 = sand.u32 %s261, 1
          %s1059 = scalar_lea.sflag [#allocation10], %s1058
          %s1060 = sand.u32 %s261, 1
          %s1061 = smul.addr %s1060, 16
          %s1062 = scalar_lea.vmem [#allocation9], %s1061
          %1064 = dma.done %s1059, 256
        $region88: #{tpu_custom_call.1} parent=79 // pred_fallthru
          _
      $region80: #{tpu_custom_call.1} parent=5 // pred_fallthru
        _
    $region6: #{tpu_custom_call.1} parent=1 // loop_footer
      %s31 = sadd.s32 1, %s27
    $region7: #{tpu_custom_call.1} parent=1 // loop_footer_branch
      %26 = sbr.rel target = $region3
    $region8: #{tpu_custom_call.1} parent=1 // loop_exit
      _
    %1065 = vsyncpa [#allocation3], 1
    %s1066 = scalar_lea.sflag [#allocation3], 1
    %1067 = vsyncpa %s1066, 1
    %1068 = vsyncpa [#allocation6], 1
    %1069 = vsyncpa [#allocation4], 1
    %s1070 = scalar_lea.sflag [#allocation4], 1
    %1071 = vsyncpa %s1070, 1
    %1072 = vsyncpa [#allocation10], 1
    %s1073 = scalar_lea.sflag [#allocation10], 1
    %1074 = vsyncpa %s1073, 1

</llo_original>
